<compile_context>
chip_gen: v6e
topology: v6e:2x2x1
jax: 0.10.0
libtpu: 0.0.40
codegen_flags: <defaults>
</compile_context>

<pallas_src>
import jax
import jax.numpy as jnp
from jax import lax
from jax.experimental import pallas as pl
from jax.experimental.pallas import tpu as pltpu


def _round_up(x: int, m: int) -> int:
    return (x + m - 1) // m * m


# ---------------------------------------------------------------------------
# Kernel 1: latent projection, computed once for the whole batch.
#           (B, L) @ (L, H) -> (B, H) f32
# ---------------------------------------------------------------------------
def _latent_proj_kernel(z_ref, w_ref, out_ref):
    out_ref[...] = jnp.dot(
        z_ref[...], w_ref[...], preferred_element_type=jnp.float32
    ).astype(out_ref.dtype)


def latent_projection(latent_z, w_lat):
    B, L = latent_z.shape
    L2, H = w_lat.shape
    assert L == L2
    return pl.pallas_call(
        _latent_proj_kernel,
        out_shape=jax.ShapeDtypeStruct((B, H), jnp.float32),
        grid_spec=pltpu.PrefetchScalarGridSpec(
            num_scalar_prefetch=0,
            grid=(1,),
            in_specs=[
                pl.BlockSpec((B, L), lambda i: (0, 0)),
                pl.BlockSpec((L, H), lambda i: (0, 0)),
            ],
            out_specs=pl.BlockSpec((B, H), lambda i: (0, 0)),
        ),
    )(latent_z, w_lat)


# ---------------------------------------------------------------------------
# Kernel 2: token-tiled embedding gather + broadcast add.
#   grid = (B, S_padded // T)
#   Each step: issue T row DMAs wte[ids] -> (T, H) VMEM slab, wait the counted
#   DMA semaphore, add the (1, H) latent row, store one lane-dense (T, H) tile.
# ---------------------------------------------------------------------------
def _embed_add_kernel(ids_ref, lat_ref, wte_hbm, out_ref, emb_buf, sem):
    b = pl.program_id(0)
    t = pl.program_id(1)
    T, H = emb_buf.shape
    Sp = pl.num_programs(1) * T          # padded sequence length
    base = b * Sp + t * T                # flat index into 1-D ids

    # Issue all T row-gather DMAs; they are all in flight concurrently.
    def _issue(i, carry):
        tok = ids_ref[base + i]
        pltpu.make_async_copy(wte_hbm.at[tok], emb_buf.at[i], sem).start()
        return carry

    lax.fori_loop(0, T, _issue, 0)

    # Latent embedding row for this batch element (resident (B, H) block).
    lat = lat_ref[pl.ds(b, 1), :].astype(jnp.float32)          # (1, H)

    # Drain the counted DMA semaphore: one wait per issued row copy.
    def _drain(i, carry):
        pltpu.make_async_copy(wte_hbm.at[0], emb_buf.at[i], sem).wait()
        return carry

    lax.fori_loop(0, T, _drain, 0)

    fused = emb_buf[...].astype(jnp.float32) + lat              # (T, H)
    out_ref[...] = fused.reshape(out_ref.shape).astype(out_ref.dtype)


def decoder_inputs_embeds(input_ids, latent_z, w_lat, wte,
                          *, token_tile: int = 256, out_dtype=None):
    """Pallas wrapper: returns inputs_embeds [B, S, H]."""
    B, S = input_ids.shape
    L, H = w_lat.shape
    V, H2 = wte.shape
    assert H == H2
    if out_dtype is None:
        out_dtype = wte.dtype

    # Hoisted latent projection: once per batch (not per token / per grid step).
    latent_emb = latent_projection(latent_z, w_lat)             # (B, H) f32

    # Token tiling: T tokens per grid step; pad S up to a multiple of T.
    # T is a multiple of 8 (sublane) and H is the full last dim (lane-dense
    # unmasked stores).  At production H (e.g. 4096) keep T<=256 for v7x's
    # 64 MiB VMEM; prefer bf16 wte/out for the memory-bound path.
    T = min(token_tile, _round_up(S, 8))
    Sp = _round_up(S, T)

    ids = input_ids.astype(jnp.int32)
    if Sp != S:
        ids = jnp.pad(ids, ((0, 0), (0, Sp - S)))               # pad with id 0
    ids_flat = ids.reshape(B * Sp)                              # 1-D SMEM prefetch

    grid = (B, Sp // T)

    grid_spec = pltpu.PrefetchScalarGridSpec(
        num_scalar_prefetch=1,              # ids_flat -> SMEM
        grid=grid,
        in_specs=[
            # latent embedding: full (B, H) block kept resident in VMEM
            pl.BlockSpec((B, H), lambda b, t, ids: (0, 0)),
            # embedding table stays in HBM; rows gathered by manual DMA
            pl.BlockSpec(memory_space=pl.ANY),
        ],
        out_specs=pl.BlockSpec((1, T, H), lambda b, t, ids: (b, t, 0)),
        scratch_shapes=[
            pltpu.VMEM((T, H), wte.dtype),      # gathered embedding rows
            pltpu.SemaphoreType.DMA(()),        # counted DMA semaphore
        ],
    )

    out = pl.pallas_call(
        _embed_add_kernel,
        out_shape=jax.ShapeDtypeStruct((B, Sp, H), out_dtype),
        grid_spec=grid_spec,
        compiler_params=pltpu.CompilerParams(
            # No cross-step state -> both axes safe to shard across v7x's 2 TCs.
            dimension_semantics=("parallel", "parallel"),
        ),
    )(ids_flat, latent_emb, wte)

    return out[:, :S, :] if Sp != S else out


def _reference(input_ids, latent_z, w_lat, wte, out_dtype):
    lat = (latent_z @ w_lat)[:, None, :]                        # f32
    emb = wte[input_ids].astype(jnp.float32)
    return (lat + emb).astype(out_dtype)


if __name__ == "__main__":
    # Small, deterministic shapes consistent with the module's forward.
    B, S = 2, 8            # batch, sequence length
    H = 128                # hidden_size
    L = 32                 # latent_size
    V = 256                # vocab size of the (synthetic) embedding table

    key = jax.random.PRNGKey(0)
    k_ids, k_z, k_w, k_wte = jax.random.split(key, 4)

    input_ids = jax.random.randint(k_ids, (B, S), 0, V, dtype=jnp.int32)
    latent_z = jax.random.normal(k_z, (B, L), dtype=jnp.float32)
    # nn.Linear(latent_size, hidden_size, bias=False).weight has shape [H, L];
    # we store its transpose [L, H] so the kernel does z @ W directly.
    w_lat = jax.random.normal(k_w, (L, H), dtype=jnp.float32) * 0.02
    wte_f32 = jax.random.normal(k_wte, (V, H), dtype=jnp.float32) * 0.02

    # --- f32 path (tight correctness check) --------------------------------
    out = decoder_inputs_embeds(input_ids, latent_z, w_lat, wte_f32)
    out = jax.block_until_ready(out)
    ref = _reference(input_ids, latent_z, w_lat, wte_f32, jnp.float32)
    assert out.shape == (B, S, H)
    assert jnp.allclose(out, ref, atol=1e-5, rtol=1e-5), "f32 mismatch"

    # --- bf16 embedding table / output (memory-bound production path) ------
    wte_bf16 = wte_f32.astype(jnp.bfloat16)
    out_bf = decoder_inputs_embeds(input_ids, latent_z, w_lat, wte_bf16,
                                   out_dtype=jnp.bfloat16)
    out_bf = jax.block_until_ready(out_bf)
    ref_bf = _reference(input_ids, latent_z, w_lat, wte_bf16, jnp.bfloat16)
    assert out_bf.shape == (B, S, H)
    assert jnp.allclose(out_bf.astype(jnp.float32), ref_bf.astype(jnp.float32),
                        atol=2e-2, rtol=2e-2), "bf16 mismatch"

    # --- ragged sequence length (exercises padding + tail slice) -----------
    S2 = 12
    ids2 = jax.random.randint(k_ids, (B, S2), 0, V, dtype=jnp.int32)
    out2 = decoder_inputs_embeds(ids2, latent_z, w_lat, wte_f32)
    out2 = jax.block_until_ready(out2)
    ref2 = _reference(ids2, latent_z, w_lat, wte_f32, jnp.float32)
    assert out2.shape == (B, S2, H)
    assert jnp.allclose(out2, ref2, atol=1e-5, rtol=1e-5), "ragged mismatch"

    print("KERNEL_OK")
</pallas_src>

<mosaic_0001>
module attributes {stable_mosaic.version = 11 : i64} {
  func.func @_latent_proj_kernel(%arg0: i32, %arg1: memref<2x32xf32, #tpu.memory_space<vmem>>, %arg2: memref<32x128xf32, #tpu.memory_space<vmem>>, %arg3: memref<2x128xf32, #tpu.memory_space<vmem>>) attributes {dimension_semantics = [#tpu.dimension_semantics<arbitrary>], iteration_bounds = array<i64: 1>, scalar_prefetch = 0 : i64, scratch_operands = 0 : i64, tpu.core_type = #tpu.core_type<tc>, window_params = [{pipeline_mode = #tpu.pipeline_mode<synchronous>, transform_indices = @transform_0, window_bounds = array<i64: 2, 32>}, {pipeline_mode = #tpu.pipeline_mode<synchronous>, transform_indices = @transform_1, window_bounds = array<i64: 32, 128>}, {pipeline_mode = #tpu.pipeline_mode<synchronous>, transform_indices = @transform_2, window_bounds = array<i64: 2, 128>}]} {
    %c0 = arith.constant 0 : index
    %c0_0 = arith.constant 0 : index
    %0 = vector.load %arg1[%c0, %c0_0] : memref<2x32xf32, #tpu.memory_space<vmem>>, vector<2x32xf32>
    %c0_1 = arith.constant 0 : index
    %c0_2 = arith.constant 0 : index
    %1 = vector.load %arg2[%c0_1, %c0_2] : memref<32x128xf32, #tpu.memory_space<vmem>>, vector<32x128xf32>
    %cst = arith.constant dense<0.000000e+00> : vector<2x128xf32>
    %2 = tpu.matmul %0, %1, %cst {dimension_numbers = #tpu.dot_dimension_numbers<[1], [0], [0], [1], [0, 0, 1, 1], [], []>} : vector<2x32xf32>, vector<32x128xf32>, vector<2x128xf32> -> vector<2x128xf32>
    %c0_3 = arith.constant 0 : index
    %c0_4 = arith.constant 0 : index
    %3 = vector.load %arg3[%c0_3, %c0_4] : memref<2x128xf32, #tpu.memory_space<vmem>>, vector<2x128xf32>
    tpu.vector_store %arg3[%c0_3, %c0_4], %2 {strides = array<i32>} : memref<2x128xf32, #tpu.memory_space<vmem>>, vector<2x128xf32>,
    return
  }
  func.func @transform_0(%arg0: i32) -> (i32, i32) {
    %c0_i32 = arith.constant 0 : i32
    %c0_i32_0 = arith.constant 0 : i32
    %c0_i32_1 = arith.constant 0 : i32
    return %c0_i32, %c0_i32_0 : i32, i32
  }
  func.func @transform_1(%arg0: i32) -> (i32, i32) {
    %c0_i32 = arith.constant 0 : i32
    %c0_i32_0 = arith.constant 0 : i32
    %c0_i32_1 = arith.constant 0 : i32
    return %c0_i32, %c0_i32_0 : i32, i32
  }
  func.func @transform_2(%arg0: i32) -> (i32, i32) {
    %c0_i32 = arith.constant 0 : i32
    %c0_i32_0 = arith.constant 0 : i32
    %c0_i32_1 = arith.constant 0 : i32
    return %c0_i32, %c0_i32_0 : i32, i32
  }
}

</mosaic_0001>

<llo_original>
// kernel: tpu_custom_call.1
$region0: #{tpu_custom_call.1}
  #allocation0 [shape = 'u32[]', space=smem, size = 0x4, offset = 0x4, fixed_abs, tag = 'smem constant byte address 0x4 - core index']
  #allocation1 [shape = 'u32[144,128]{1,0:T(1,128)}', space=vmem, size = 0x12000, scoped, tag = 'internal scratch']
  %s0 = inlined_call_operand.hbm [shape: f32[2,32], index: 0, kind: input, shape index: {}]
  %s1 = inlined_call_operand.hbm [shape: f32[32,128], index: 1, kind: input, shape index: {}]
  %s2 = inlined_call_operand.hbm [shape: f32[2,128], index: 2, kind: output, shape index: {}]
  %s3 = sld [smem:[#allocation0]]
  $region26: #{tpu_custom_call.1} parent=0
    _
  %s5 = ssub.s32 1, %s3
  %s6 = scalar_select 0, %s5, %s3
  $region1: #{tpu_custom_call.1} parent=0
    #allocation2 [shape = 'u8[1024]{0}', space=vmem, size = 0x400, scoped, tag = 'input window, operand 0, single buffered']
    #allocation3 [shape = 's32[1]{0}', space=sflag, size = 0x4, scoped, tag = 'scoped memory for tpu_custom_call.1']
    #allocation4 [shape = 's32[1]{0}', space=sflag, size = 0x4, scoped, tag = 'scoped memory for tpu_custom_call.1']
    #allocation5 [shape = 'u8[16384]{0}', space=vmem, size = 0x4000, scoped, tag = 'input window, operand 1, single buffered']
    #allocation6 [shape = 's32[1]{0}', space=sflag, size = 0x4, scoped, tag = 'scoped memory for tpu_custom_call.1']
    #allocation7 [shape = 'u8[1024]{0}', space=vmem, size = 0x400, scoped, tag = 'output window, operand 0, single buffered']
    %7 = vsyncpa [#allocation3], 0
    %8 = vsyncpa [#allocation6], 0
    %9 = vsyncpa [#allocation4], 0
    // Predicated region
    $region2: #{tpu_custom_call.1} parent=1 // pred_check
      _
    $region3: #{tpu_custom_call.1} parent=1 // pred_check_branch
      %11 = sbr.rel (0) target = $region5
    $region4: #{tpu_custom_call.1} parent=1 // pred_region
      %s13 = ssub.s32 32, 32
      %14 = vsyncadd [#allocation3], %s13
      %s16 = sshll.u32 [#allocation2], 4
      %s17 = int_to_ptr.vmem [resolvable:$true] %s16
      %19 = dma.hbm_to_vmem [thread:$0]  %s0, 32, %s17, [#allocation3]
    $region5: #{tpu_custom_call.1} parent=1 // pred_fallthru
      _
    // Predicated region
    $region6: #{tpu_custom_call.1} parent=1 // pred_check
      _
    $region7: #{tpu_custom_call.1} parent=1 // pred_check_branch
      %21 = sbr.rel (0) target = $region9
    $region8: #{tpu_custom_call.1} parent=1 // pred_region
      %s23 = ssub.s32 512, 512
      %24 = vsyncadd [#allocation6], %s23
      %s25 = sshll.u32 [#allocation5], 4
      %s26 = int_to_ptr.vmem [resolvable:$true] %s25
      %31 = dma.hbm_to_vmem [thread:$0]  %s1, 512, %s26, [#allocation6], 128, 128, 8
    $region9: #{tpu_custom_call.1} parent=1 // pred_fallthru
      _
    // Predicated region
    $region10: #{tpu_custom_call.1} parent=1 // pred_check
      _
    $region11: #{tpu_custom_call.1} parent=1 // pred_check_branch
      %33 = sbr.rel (0) target = $region13
    $region12: #{tpu_custom_call.1} parent=1 // pred_region
      %34 = dma.done [#allocation3], 32
    $region13: #{tpu_custom_call.1} parent=1 // pred_fallthru
      _
    // Predicated region
    $region14: #{tpu_custom_call.1} parent=1 // pred_check
      _
    $region15: #{tpu_custom_call.1} parent=1 // pred_check_branch
      %36 = sbr.rel (0) target = $region17
    $region16: #{tpu_custom_call.1} parent=1 // pred_region
      %37 = dma.done [#allocation6], 512
    $region17: #{tpu_custom_call.1} parent=1 // pred_fallthru
      _
    %v38 = vld [vmem:[#allocation2] sm:$0x3]
    %v39 = vld [vmem:[#allocation5] sm:$0xff]
    %v40 = vld [vmem:[#allocation5 + $0x8] sm:$0xff]
    %v41 = vld [vmem:[#allocation5 + $0x10] sm:$0xff]
    %v42 = vld [vmem:[#allocation5 + $0x18] sm:$0xff]
    %vm43 = vcmask 261120
    %v45 = vsel %vm43, %v38, 0
    %47 = vmatprep.subr.mxu0 0.0
    %48 = vmatpush1.msra.mxu0 0.0
    %49 = vmatprep.subr.mxu0 0.0
    %50 = vmatpush1.msra.mxu0 0.0
    %51 = vmatprep.subr.mxu0 0.0
    %52 = vmatpush1.msra.mxu0 0.0
    %53 = vmatprep.subr.mxu0 0.0
    %54 = vmatpush1.msra.mxu0 0.0
    %55 = vmatprep.subr.mxu0 0.0
    %56 = vmatpush1.msra.mxu0 0.0
    %57 = vmatprep.subr.mxu0 0.0
    %58 = vmatpush1.msra.mxu0 0.0
    %59 = vmatprep.subr.mxu0 0.0
    %60 = vmatpush1.msra.mxu0 0.0
    %61 = vmatprep.subr.mxu0 0.0
    %62 = vmatpush1.msra.mxu0 0.0
    %63 = vmatprep.subr.mxu0 0.0
    %64 = vmatpush1.msra.mxu0 0.0
    %65 = vmatprep.subr.mxu0 0.0
    %66 = vmatpush1.msra.mxu0 0.0
    %67 = vmatprep.subr.mxu0 0.0
    %68 = vmatpush1.msra.mxu0 0.0
    %69 = vmatprep.subr.mxu0 0.0
    %70 = vmatpush1.msra.mxu0 0.0
    %71 = vmatprep.subr.mxu0 0.0
    %72 = vmatpush1.msra.mxu0 %v42
    %73 = vmatprep.subr.mxu0 0.0
    %74 = vmatpush1.msra.mxu0 %v41
    %75 = vmatprep.subr.mxu0 0.0
    %76 = vmatpush1.msra.mxu0 %v40
    %77 = vmatprep.subr.mxu0 0.0
    %78 = vmatpush1.msra.mxu0 %v39
    %79 = vmatprep.subr.mxu0 0.0
    %80 = vmatpush2.msra.mxu0 0.0
    %81 = vmatprep.subr.mxu0 0.0
    %82 = vmatpush2.msra.mxu0 0.0
    %83 = vmatprep.subr.mxu0 0.0
    %84 = vmatpush2.msra.mxu0 0.0
    %85 = vmatprep.subr.mxu0 0.0
    %86 = vmatpush2.msra.mxu0 0.0
    %87 = vmatprep.subr.mxu0 0.0
    %88 = vmatpush2.msra.mxu0 0.0
    %89 = vmatprep.subr.mxu0 0.0
    %90 = vmatpush2.msra.mxu0 0.0
    %91 = vmatprep.subr.mxu0 0.0
    %92 = vmatpush2.msra.mxu0 0.0
    %93 = vmatprep.subr.mxu0 0.0
    %94 = vmatpush2.msra.mxu0 0.0
    %95 = vmatprep.subr.mxu0 0.0
    %96 = vmatpush2.msra.mxu0 0.0
    %97 = vmatprep.subr.mxu0 0.0
    %98 = vmatpush2.msra.mxu0 0.0
    %99 = vmatprep.subr.mxu0 0.0
    %100 = vmatpush2.msra.mxu0 0.0
    %101 = vmatprep.subr.mxu0 0.0
    %102 = vmatpush2.msra.mxu0 0.0
    %103 = vmatprep.subr.mxu0 0.0
    %104 = vmatpush2.msra.mxu0 0.0
    %105 = vmatprep.subr.mxu0 0.0
    %106 = vmatpush2.msra.mxu0 0.0
    %107 = vmatprep.subr.mxu0 0.0
    %108 = vmatpush2.msra.mxu0 0.0
    %109 = vmatprep.subr.mxu0 0.0
    %110 = vmatpush2.msra.mxu0 0.0
    %111 = vmatprep.mubr.f32.mxu0 0.0
    %112 = vmatmul.mubr.f32.gmra.mxu0 %v45
    %v113 = vpop.f32.mrf.mxu0
    %v114 = vadd.f32 0.0, %v113
    %v115 = vpop.f32.mrf.mxu0
    %116 = vdwg.mxu0
    %117 = vst [vmem:[#allocation7] sm:$0x3] %v114
    // Predicated region
    $region18: #{tpu_custom_call.1} parent=1 // pred_check
      _
    $region19: #{tpu_custom_call.1} parent=1 // pred_check_branch
      %119 = sbr.rel (0) target = $region21
    $region20: #{tpu_custom_call.1} parent=1 // pred_region
      %s121 = ssub.s32 32, 32
      %122 = vsyncadd [#allocation4], %s121
      %s124 = sshll.u32 [#allocation7], 4
      %s125 = int_to_ptr.vmem [resolvable:$true] %s124
      %127 = dma.vmem_to_hbm [thread:$0]  %s125, 32, %s2, [#allocation4]
    $region21: #{tpu_custom_call.1} parent=1 // pred_fallthru
      _
    // Predicated region
    $region22: #{tpu_custom_call.1} parent=1 // pred_check
      _
    $region23: #{tpu_custom_call.1} parent=1 // pred_check_branch
      %129 = sbr.rel (0) target = $region25
    $region24: #{tpu_custom_call.1} parent=1 // pred_region
      %130 = dma.done [#allocation4], 32
    $region25: #{tpu_custom_call.1} parent=1 // pred_fallthru
      _
    %131 = vsyncpa [#allocation3], 1
    %132 = vsyncpa [#allocation6], 1
    %133 = vsyncpa [#allocation4], 1

</llo_original>
